<compile_context>
chip_gen: v7x
topology: tpu7x:2x2x1
jax: 0.10.0
libtpu: 0.0.40
codegen_flags: <defaults>
</compile_context>

<pallas_src>
import math

import jax
import jax.numpy as jnp
from jax.experimental import pallas as pl
from jax.experimental.pallas import tpu as pltpu


def _attention_kernel(q_ref, k_ref, v_ref, mask_ref, o_ref, *, scale):
    # Per grid step (one batch element, fully VMEM resident):
    #   q_ref:(1,Sq,D)  k_ref:(1,Sk,D)  v_ref:(1,Sk,Dv)  mask_ref:(1,Sk)
    # Pre-scale Q (cheaper than scaling the (1,Sq,Sk) logits), then feed the
    # MXU with bf16 inputs and f32 accumulation.
    q = (q_ref[...] * scale).astype(jnp.bfloat16)   # (1, Sq, D)
    k = k_ref[...].astype(jnp.bfloat16)             # (1, Sk, D)
    m = mask_ref[...]                               # (1, Sk)  f32

    # Q @ K^T as a contraction on the last axes -> no explicit K transpose.
    qk = jnp.einsum("bqd,bkd->bqk", q, k,
                    preferred_element_type=jnp.float32)     # (1, Sq, Sk)

    # Additive mask, broadcast over batch and query axes (PyTorch semantics).
    qk = qk + m[None]

    # Numerically-stable softmax over the key axis; normalization is deferred
    # until after the PV matmul (scale the small output, not the big P tile).
    row_max = jnp.max(qk, axis=-1, keepdims=True)
    p = jnp.exp(qk - row_max)                                # (1, Sq, Sk) f32
    denom = jnp.sum(p, axis=-1, keepdims=True)               # (1, Sq, 1)  f32

    # Unnormalized P @ V on the MXU in bf16, accumulated in f32.
    p_bf16 = p.astype(jnp.bfloat16)
    v_bf16 = v_ref[...].astype(jnp.bfloat16)                 # (1, Sk, Dv)
    out = jnp.einsum("bqk,bkd->bqd", p_bf16, v_bf16,
                     preferred_element_type=jnp.float32)     # (1, Sq, Dv)

    # Deferred normalization in f32 (EUP vrcp: own VLIW slot, ~free).
    out = out * pl.reciprocal(denom, approx=True)
    o_ref[...] = out.astype(o_ref.dtype)


def sdpa_pallas(q, k, v, mask):
    """q: (B,Sq,D)  k: (B,Sk,D)  v: (B,Sk,Dv)  mask: (1,Sk) -> (B,Sq,Dv)."""
    B, Sq, D = q.shape
    _, Sk, _ = k.shape
    Dv = v.shape[-1]
    scale = 1.0 / math.sqrt(D)

    kernel = lambda *refs: _attention_kernel(*refs, scale=scale)

    return pl.pallas_call(
        kernel,
        out_shape=jax.ShapeDtypeStruct((B, Sq, Dv), q.dtype),
        grid_spec=pltpu.PrefetchScalarGridSpec(
            num_scalar_prefetch=0,
            grid=(B,),  # one batch element per step; "parallel" -> 2 TCs on v7x
            in_specs=[
                pl.BlockSpec((1, Sq, D), lambda b: (b, 0, 0)),
                pl.BlockSpec((1, Sk, D), lambda b: (b, 0, 0)),
                pl.BlockSpec((1, Sk, Dv), lambda b: (b, 0, 0)),
                pl.BlockSpec((1, Sk), lambda b: (0, 0)),
            ],
            out_specs=pl.BlockSpec((1, Sq, Dv), lambda b: (b, 0, 0)),
        ),
        compiler_params=pltpu.CompilerParams(
            dimension_semantics=("parallel",)),
    )(q, k, v, mask)


def sdpa_reference(q, k, v, mask):
    scale = 1.0 / math.sqrt(q.shape[-1])
    qk = jnp.einsum("bqd,bkd->bqk", q, k) * scale
    qk = qk + mask[None]  # (1, Sk) broadcasts over batch & query axes
    attn = jax.nn.softmax(qk, axis=-1)
    return jnp.einsum("bqk,bkd->bqd", attn, v)


if __name__ == "__main__":
    # Small, lane-aligned shapes consistent with the module's forward.
    B, Sq, Sk, D, Dv = 2, 128, 128, 64, 64

    key = jax.random.PRNGKey(0)
    kq, kk, kv, km = jax.random.split(key, 4)

    Q16 = jax.random.normal(kq, (B, Sq, D), dtype=jnp.float32)
    K16 = jax.random.normal(kk, (B, Sk, D), dtype=jnp.float32)
    V = jax.random.normal(kv, (B, Sk, Dv), dtype=jnp.float32)
    # Additive mask: large negative where a random draw > 0.7, else 0.
    mask = jnp.where(jax.random.uniform(km, (1, Sk)) > 0.7,
                     jnp.float32(-1e8), jnp.float32(0.0))

    out = sdpa_pallas(Q16, K16, V, mask)
    out = jax.block_until_ready(out)

    ref = sdpa_reference(Q16, K16, V, mask)
    assert out.shape == (B, Sq, Dv)
    # Tolerance accounts for bf16 MXU inputs on Q/K and P/V, plus the EUP
    # approximate reciprocal (reference runs fully in f32).
    assert jnp.allclose(out, ref, atol=2e-2, rtol=2e-2), "mismatch vs reference"

    print("KERNEL_OK")
</pallas_src>

<mosaic_0001>
module attributes {stable_mosaic.version = 11 : i64} {
  func.func @_lambda_(%arg0: i32, %arg1: memref<1x128x64xf32, #tpu.memory_space<vmem>>, %arg2: memref<1x128x64xf32, #tpu.memory_space<vmem>>, %arg3: memref<1x128x64xf32, #tpu.memory_space<vmem>>, %arg4: memref<1x128xf32, #tpu.memory_space<vmem>>, %arg5: memref<1x128x64xf32, #tpu.memory_space<vmem>>) attributes {dimension_semantics = [#tpu.dimension_semantics<parallel>], iteration_bounds = array<i64: 2>, scalar_prefetch = 0 : i64, scratch_operands = 0 : i64, tpu.core_type = #tpu.core_type<tc>, window_params = [{transform_indices = @transform_0, window_bounds = array<i64: 1, 128, 64>}, {transform_indices = @transform_1, window_bounds = array<i64: 1, 128, 64>}, {transform_indices = @transform_2, window_bounds = array<i64: 1, 128, 64>}, {pipeline_mode = #tpu.pipeline_mode<synchronous>, transform_indices = @transform_3, window_bounds = array<i64: 1, 128>}, {transform_indices = @transform_4, window_bounds = array<i64: 1, 128, 64>}]} {
    %c0 = arith.constant 0 : index
    %c0_0 = arith.constant 0 : index
    %c0_1 = arith.constant 0 : index
    %0 = vector.load %arg1[%c0, %c0_0, %c0_1] : memref<1x128x64xf32, #tpu.memory_space<vmem>>, vector<1x128x64xf32>
    %cst = arith.constant 1.250000e-01 : f32
    %1 = vector.broadcast %cst : f32 to vector<1x128x64xf32>
    %2 = arith.mulf %0, %1 : vector<1x128x64xf32>
    %3 = arith.truncf %2 : vector<1x128x64xf32> to vector<1x128x64xbf16>
    %c0_2 = arith.constant 0 : index
    %c0_3 = arith.constant 0 : index
    %c0_4 = arith.constant 0 : index
    %4 = vector.load %arg2[%c0_2, %c0_3, %c0_4] : memref<1x128x64xf32, #tpu.memory_space<vmem>>, vector<1x128x64xf32>
    %5 = arith.truncf %4 : vector<1x128x64xf32> to vector<1x128x64xbf16>
    %c0_5 = arith.constant 0 : index
    %c0_6 = arith.constant 0 : index
    %6 = vector.load %arg4[%c0_5, %c0_6] : memref<1x128xf32, #tpu.memory_space<vmem>>, vector<1x128xf32>
    "tpu.trace_start"() <{level = 10 : i32, message = "bqd,bkd->bqk"}> : () -> ()
    %cst_7 = arith.constant dense<0.000000e+00> : vector<1x128x128xf32>
    %7 = tpu.matmul %3, %5, %cst_7 {dimension_numbers = #tpu.dot_dimension_numbers<[2], [2], [1], [1], [0, 0, 0, 1, 1, 1], [0], [0]>} : vector<1x128x64xbf16>, vector<1x128x64xbf16>, vector<1x128x128xf32> -> vector<1x128x128xf32>
    "tpu.trace_stop"() : () -> ()
    %8 = vector.shape_cast %6 : vector<1x128xf32> to vector<1x1x128xf32>
    %9 = vector.broadcast %8 : vector<1x1x128xf32> to vector<1x128x128xf32>
    %10 = arith.addf %7, %9 : vector<1x128x128xf32>
    %cst_8 = arith.constant dense<0xFF800000> : vector<1x128xf32>
    %11 = vector.multi_reduction <maximumf>, %10, %cst_8 [2] : vector<1x128x128xf32> to vector<1x128xf32>
    %12 = vector.shape_cast %11 : vector<1x128xf32> to vector<1x128x1xf32>
    %13 = vector.broadcast %12 : vector<1x128x1xf32> to vector<1x128x128xf32>
    %14 = arith.subf %10, %13 : vector<1x128x128xf32>
    %15 = math.exp %14 : vector<1x128x128xf32>
    %cst_9 = arith.constant dense<0.000000e+00> : vector<1x128xf32>
    %16 = vector.multi_reduction <add>, %15, %cst_9 [2] : vector<1x128x128xf32> to vector<1x128xf32>
    %17 = vector.shape_cast %16 : vector<1x128xf32> to vector<1x128x1xf32>
    %18 = arith.truncf %15 : vector<1x128x128xf32> to vector<1x128x128xbf16>
    %c0_10 = arith.constant 0 : index
    %c0_11 = arith.constant 0 : index
    %c0_12 = arith.constant 0 : index
    %19 = vector.load %arg3[%c0_10, %c0_11, %c0_12] : memref<1x128x64xf32, #tpu.memory_space<vmem>>, vector<1x128x64xf32>
    %20 = arith.truncf %19 : vector<1x128x64xf32> to vector<1x128x64xbf16>
    "tpu.trace_start"() <{level = 10 : i32, message = "bqk,bkd->bqd"}> : () -> ()
    %cst_13 = arith.constant dense<0.000000e+00> : vector<1x128x64xf32>
    %21 = tpu.matmul %18, %20, %cst_13 {dimension_numbers = #tpu.dot_dimension_numbers<[2], [1], [1], [2], [0, 0, 0, 1, 1, 2], [0], [0]>} : vector<1x128x128xbf16>, vector<1x128x64xbf16>, vector<1x128x64xf32> -> vector<1x128x64xf32>
    "tpu.trace_stop"() : () -> ()
    %22 = tpu.reciprocal %17 {approx = true} : vector<1x128x1xf32> -> vector<1x128x1xf32>
    %23 = vector.broadcast %22 : vector<1x128x1xf32> to vector<1x128x64xf32>
    %24 = arith.mulf %21, %23 : vector<1x128x64xf32>
    %c0_14 = arith.constant 0 : index
    %c0_15 = arith.constant 0 : index
    %c0_16 = arith.constant 0 : index
    %25 = vector.load %arg5[%c0_14, %c0_15, %c0_16] : memref<1x128x64xf32, #tpu.memory_space<vmem>>, vector<1x128x64xf32>
    tpu.vector_store %arg5[%c0_14, %c0_15, %c0_16], %24 {strides = array<i32>} : memref<1x128x64xf32, #tpu.memory_space<vmem>>, vector<1x128x64xf32>,
    return
  }
  func.func @transform_0(%arg0: i32) -> (i32, i32, i32) {
    %c0_i32 = arith.constant 0 : i32
    %c0_i32_0 = arith.constant 0 : i32
    %c0_i32_1 = arith.constant 0 : i32
    return %arg0, %c0_i32, %c0_i32_0 : i32, i32, i32
  }
  func.func @transform_1(%arg0: i32) -> (i32, i32, i32) {
    %c0_i32 = arith.constant 0 : i32
    %c0_i32_0 = arith.constant 0 : i32
    %c0_i32_1 = arith.constant 0 : i32
    return %arg0, %c0_i32, %c0_i32_0 : i32, i32, i32
  }
  func.func @transform_2(%arg0: i32) -> (i32, i32, i32) {
    %c0_i32 = arith.constant 0 : i32
    %c0_i32_0 = arith.constant 0 : i32
    %c0_i32_1 = arith.constant 0 : i32
    return %arg0, %c0_i32, %c0_i32_0 : i32, i32, i32
  }
  func.func @transform_3(%arg0: i32) -> (i32, i32) {
    %c0_i32 = arith.constant 0 : i32
    %c0_i32_0 = arith.constant 0 : i32
    %c0_i32_1 = arith.constant 0 : i32
    return %c0_i32, %c0_i32_0 : i32, i32
  }
  func.func @transform_4(%arg0: i32) -> (i32, i32, i32) {
    %c0_i32 = arith.constant 0 : i32
    %c0_i32_0 = arith.constant 0 : i32
    %c0_i32_1 = arith.constant 0 : i32
    return %arg0, %c0_i32, %c0_i32_0 : i32, i32, i32
  }
}

</mosaic_0001>

<llo_original>
// kernel: tpu_custom_call.1
$region0: #{tpu_custom_call.1}
  #allocation0 [shape = 'u32[]', space=smem, size = 0x4, offset = 0x4, fixed_abs, tag = 'smem constant byte address 0x4 - core index']
  #allocation1 [shape = 'u32[144,128]{1,0:T(1,128)}', space=vmem, size = 0x12000, scoped, tag = 'internal scratch']
  %s0 = inlined_call_operand.vmem [shape: f32[2,128,64], index: 0, kind: input, shape index: {}]
  %s1 = inlined_call_operand.vmem [shape: f32[2,128,64], index: 1, kind: input, shape index: {}]
  %s2 = inlined_call_operand.vmem [shape: f32[2,128,64], index: 2, kind: input, shape index: {}]
  %s3 = inlined_call_operand.vmem [shape: f32[1,128], index: 3, kind: input, shape index: {}]
  %s4 = inlined_call_operand.vmem [shape: f32[2,128,64], index: 4, kind: output, shape index: {}]
  %s5 = sld [smem:[#allocation0]]
  $region49: #{tpu_custom_call.1} parent=0
    _
  %s7 = ssub.s32 1, %s5
  %s8 = scalar_select 0, %s7, %s5
  loop: start=0, step=1, limit=4
  $region2: #{tpu_custom_call.1} parent=0 // loop_pre_header
    _
  $region3: #{tpu_custom_call.1} parent=0 // loop_header
    %s10 = sphi 0, %s14
    %p11 = scmp.ge.s32.totalorder %s10, 4
    %s20 = sphi 0, %s22
    %s23 = sphi 0, %s20
    %s24 = sphi 0, %s23
    %s40 = sphi 0, %s24
    %s46 = sphi 0, %s48
    %s49 = sphi 0, %s46
    %s50 = sphi 0, %s49
    %s66 = sphi 0, %s50
    %s72 = sphi 0, %s74
    %s75 = sphi 0, %s72
    %s76 = sphi 0, %s75
    %s92 = sphi 0, %s76
    %s96 = sphi 0, %s96
    %s98 = sphi 0, %s96
    %s99 = sphi 0, %s98
    %s113 = sphi 0, %s99
    %s119 = sphi 0, %s121
    %s122 = sphi 0, %s119
    %s123 = sphi 0, %s122
    %s139 = sphi 0, %s123
  $region4: #{tpu_custom_call.1} parent=0 // loop_header_branch
    %13 = sbr.rel (%p11) target = $region8
  $region5: #{tpu_custom_call.1} parent=0 // loop_body
    %s15 = ssub.s32 %s10, 1
    %s16 = ssub.s32 %s10, 2
    %s17 = sadd.s32 %s10, 1
    %s18 = ssub.s32 %s10, %s17
    %p19 = scmp.eq.s32.totalorder %s18, 0
    %s21 = sadd.s32 %s20, 1
    %s22 = scalar_select %p19, %s20, %s21
    %p25 = pneg %p19
    %p26 = scmp.eq.s32.totalorder %s10, 1
    %p27 = por %p25, %p26
    %p28 = scmp.ne.s32.totalorder %s20, %s23
    %p29 = scmp.eq.s32.totalorder %s10, 0
    %p30 = por %p28, %p29
    %p31 = scmp.ne.s32.totalorder %s20, %s23
    %p32 = scmp.eq.s32.totalorder %s15, 1
    %p33 = por %p31, %p32
    %p34 = scmp.ne.s32.totalorder %s23, %s24
    %p35 = scmp.eq.s32.totalorder %s15, 0
    %p36 = por %p34, %p35
    %p37 = scmp.ne.s32.totalorder %s23, %s24
    %p38 = scmp.eq.s32.totalorder %s16, 1
    %p39 = por %p37, %p38
    %p41 = scmp.ne.s32.totalorder %s24, %s40
    %p42 = scmp.eq.s32.totalorder %s16, 0
    %p43 = por %p41, %p42
    %s44 = ssub.s32 %s10, %s17
    %p45 = scmp.eq.s32.totalorder %s44, 0
    %s47 = sadd.s32 %s46, 1
    %s48 = scalar_select %p45, %s46, %s47
    %p51 = pneg %p45
    %p52 = scmp.eq.s32.totalorder %s10, 1
    %p53 = por %p51, %p52
    %p54 = scmp.ne.s32.totalorder %s46, %s49
    %p55 = scmp.eq.s32.totalorder %s10, 0
    %p56 = por %p54, %p55
    %p57 = scmp.ne.s32.totalorder %s46, %s49
    %p58 = scmp.eq.s32.totalorder %s15, 1
    %p59 = por %p57, %p58
    %p60 = scmp.ne.s32.totalorder %s49, %s50
    %p61 = scmp.eq.s32.totalorder %s15, 0
    %p62 = por %p60, %p61
    %p63 = scmp.ne.s32.totalorder %s49, %s50
    %p64 = scmp.eq.s32.totalorder %s16, 1
    %p65 = por %p63, %p64
    %p67 = scmp.ne.s32.totalorder %s50, %s66
    %p68 = scmp.eq.s32.totalorder %s16, 0
    %p69 = por %p67, %p68
    %s70 = ssub.s32 %s10, %s17
    %p71 = scmp.eq.s32.totalorder %s70, 0
    %s73 = sadd.s32 %s72, 1
    %s74 = scalar_select %p71, %s72, %s73
    %p77 = pneg %p71
    %p78 = scmp.eq.s32.totalorder %s10, 1
    %p79 = por %p77, %p78
    %p80 = scmp.ne.s32.totalorder %s72, %s75
    %p81 = scmp.eq.s32.totalorder %s10, 0
    %p82 = por %p80, %p81
    %p83 = scmp.ne.s32.totalorder %s72, %s75
    %p84 = scmp.eq.s32.totalorder %s15, 1
    %p85 = por %p83, %p84
    %p86 = scmp.ne.s32.totalorder %s75, %s76
    %p87 = scmp.eq.s32.totalorder %s15, 0
    %p88 = por %p86, %p87
    %p89 = scmp.ne.s32.totalorder %s75, %s76
    %p90 = scmp.eq.s32.totalorder %s16, 1
    %p91 = por %p89, %p90
    %p93 = scmp.ne.s32.totalorder %s76, %s92
    %p94 = scmp.eq.s32.totalorder %s16, 0
    %p95 = por %p93, %p94
    %s97 = sadd.s32 %s96, 1
    %p100 = scmp.eq.s32.totalorder %s10, 1
    %p101 = scmp.ne.s32.totalorder %s96, %s98
    %p102 = scmp.eq.s32.totalorder %s10, 0
    %p103 = por %p101, %p102
    %p104 = scmp.ne.s32.totalorder %s96, %s98
    %p105 = scmp.eq.s32.totalorder %s15, 1
    %p106 = por %p104, %p105
    %p107 = scmp.ne.s32.totalorder %s98, %s99
    %p108 = scmp.eq.s32.totalorder %s15, 0
    %p109 = por %p107, %p108
    %p110 = scmp.ne.s32.totalorder %s98, %s99
    %p111 = scmp.eq.s32.totalorder %s16, 1
    %p112 = por %p110, %p111
    %p114 = scmp.ne.s32.totalorder %s99, %s113
    %p115 = scmp.eq.s32.totalorder %s16, 0
    %p116 = por %p114, %p115
    %s117 = ssub.s32 %s10, %s17
    %p118 = scmp.eq.s32.totalorder %s117, 0
    %s120 = sadd.s32 %s119, 1
    %s121 = scalar_select %p118, %s119, %s120
    %p124 = pneg %p118
    %p125 = scmp.eq.s32.totalorder %s10, 1
    %p126 = por %p124, %p125
    %p127 = scmp.ne.s32.totalorder %s119, %s122
    %p128 = scmp.eq.s32.totalorder %s10, 0
    %p129 = por %p127, %p128
    %p130 = scmp.ne.s32.totalorder %s119, %s122
    %p131 = scmp.eq.s32.totalorder %s15, 1
    %p132 = por %p130, %p131
    %p133 = scmp.ne.s32.totalorder %s122, %s123
    %p134 = scmp.eq.s32.totalorder %s15, 0
    %p135 = por %p133, %p134
    %p136 = scmp.ne.s32.totalorder %s122, %s123
    %p137 = scmp.eq.s32.totalorder %s16, 1
    %p138 = por %p136, %p137
    %p140 = scmp.ne.s32.totalorder %s123, %s139
    %p141 = scmp.eq.s32.totalorder %s16, 0
    %p142 = por %p140, %p141
    %p143 = scmp.le.s32.totalorder 1, %s10
    %p144 = scmp.lt.s32.totalorder %s10, 3
    %p145 = pnand %p143, %p144
    %p146 = pneg %p145
    // Predicated region
    $region9: #{tpu_custom_call.1} parent=5 // pred_check
      _
    $region10: #{tpu_custom_call.1} parent=5 // pred_check_branch
      %148 = sbr.rel (%p145) target = $region12
    $region11: #{tpu_custom_call.1} parent=5 // pred_region
      %s149 = ssub.s32 %s10, 1
      // Predicated region
      $region13: #{tpu_custom_call.1} parent=11 // pred_check
        %p150 = pneg %p109
      $region14: #{tpu_custom_call.1} parent=11 // pred_check_branch
        %152 = sbr.rel (%p150) target = $region16
      $region15: #{tpu_custom_call.1} parent=11 // pred_region
        _
      $region16: #{tpu_custom_call.1} parent=11 // pred_fallthru
        _
    $region12: #{tpu_custom_call.1} parent=5 // pred_fallthru
      _
    %p153 = scmp.lt.s32.totalorder %s10, 2
    // Predicated region
    $region17: #{tpu_custom_call.1} parent=5 // pred_check
      %p154 = pneg %p153
    $region18: #{tpu_custom_call.1} parent=5 // pred_check_branch
      %156 = sbr.rel (%p154) target = $region20
    $region19: #{tpu_custom_call.1} parent=5 // pred_region
      // Predicated region
      $region21: #{tpu_custom_call.1} parent=19 // pred_check
        %p157 = pneg %p30
      $region22: #{tpu_custom_call.1} parent=19 // pred_check_branch
        %159 = sbr.rel (%p157) target = $region24
      $region23: #{tpu_custom_call.1} parent=19 // pred_region
        %p160 = scmp.lt.s32.totalorder %s10, 1
        %s161 = scalar_select %p160, %s10, 1
        %s162 = smul.addr %s161, 16
        %s163 = smul.addr %s162, 8
        %s164 = scalar_lea.vmem %s0, %s163
      $region24: #{tpu_custom_call.1} parent=19 // pred_fallthru
        _
      // Predicated region
      $region25: #{tpu_custom_call.1} parent=19 // pred_check
        %p165 = pneg %p56
      $region26: #{tpu_custom_call.1} parent=19 // pred_check_branch
        %167 = sbr.rel (%p165) target = $region28
      $region27: #{tpu_custom_call.1} parent=19 // pred_region
        %p168 = scmp.lt.s32.totalorder %s10, 1
        %s169 = scalar_select %p168, %s10, 1
        %s170 = smul.addr %s169, 16
        %s171 = smul.addr %s170, 8
        %s172 = scalar_lea.vmem %s1, %s171
      $region28: #{tpu_custom_call.1} parent=19 // pred_fallthru
        _
      // Predicated region
      $region29: #{tpu_custom_call.1} parent=19 // pred_check
        %p173 = pneg %p82
      $region30: #{tpu_custom_call.1} parent=19 // pred_check_branch
        %175 = sbr.rel (%p173) target = $region32
      $region31: #{tpu_custom_call.1} parent=19 // pred_region
        %p176 = scmp.lt.s32.totalorder %s10, 1
        %s177 = scalar_select %p176, %s10, 1
        %s178 = smul.addr %s177, 16
        %s179 = smul.addr %s178, 8
        %s180 = scalar_lea.vmem %s2, %s179
      $region32: #{tpu_custom_call.1} parent=19 // pred_fallthru
        _
    $region20: #{tpu_custom_call.1} parent=5 // pred_fallthru
      _
    %p181 = scmp.le.s32.totalorder 1, %s10
    %p182 = scmp.lt.s32.totalorder %s10, 3
    %p183 = pnand %p181, %p182
    %p184 = pneg %p183
    // Predicated region
    $region33: #{tpu_custom_call.1} parent=5 // pred_check
      _
    $region34: #{tpu_custom_call.1} parent=5 // pred_check_branch
      %186 = sbr.rel (%p183) target = $region36
    $region35: #{tpu_custom_call.1} parent=5 // pred_region
      %s187 = ssub.s32 %s10, 1
      %p188 = scmp.lt.s32.totalorder %s15, 1
      %s189 = scalar_select %p188, %s15, 1
      %s190 = smul.addr %s189, 16
      %s191 = smul.addr %s190, 8
      %s192 = scalar_lea.vmem %s0, %s191
      %p193 = pneg %p36
      %p194 = pneg %p33
      %p195 = scmp.lt.s32.totalorder %s15, 1
      %s196 = scalar_select %p195, %s15, 1
      %s197 = smul.addr %s196, 16
      %s198 = smul.addr %s197, 8
      %s199 = scalar_lea.vmem %s1, %s198
      %p200 = pneg %p62
      %p201 = pneg %p59
      %p202 = scmp.lt.s32.totalorder %s15, 1
      %s203 = scalar_select %p202, %s15, 1
      %s204 = smul.addr %s203, 16
      %s205 = smul.addr %s204, 8
      %s206 = scalar_lea.vmem %s2, %s205
      %p207 = pneg %p88
      %p208 = pneg %p85
      %p209 = pneg %p109
      %p210 = pneg %p106
      %p211 = pneg %p135
      %p212 = pneg %p132
      %p213 = scmp.lt.s32.totalorder %s15, 1
      %s214 = scalar_select %p213, %s15, 1
      %s215 = smul.addr %s214, 16
      %s216 = smul.addr %s215, 8
      %s217 = scalar_lea.vmem %s4, %s216
      %p218 = scmp.lt.s32.totalorder %s15, 1
      %s219 = scalar_select %p218, %s15, 1
      %s220 = smul.addr %s219, 16
      %s221 = smul.addr %s220, 8
      %s222 = scalar_lea.vmem %s0, %s221
      %p223 = scmp.lt.s32.totalorder %s15, 1
      %s224 = scalar_select %p223, %s15, 1
      %s225 = smul.addr %s224, 16
      %s226 = smul.addr %s225, 8
      %s227 = scalar_lea.vmem %s1, %s226
      %p228 = scmp.lt.s32.totalorder %s15, 1
      %s229 = scalar_select %p228, %s15, 1
      %s230 = smul.addr %s229, 16
      %s231 = smul.addr %s230, 8
      %s232 = scalar_lea.vmem %s2, %s231
      %p233 = scmp.lt.s32.totalorder %s15, 1
      %s234 = scalar_select %p233, %s15, 1
      %s235 = smul.addr %s234, 16
      %s236 = smul.addr %s235, 8
      %s237 = scalar_lea.vmem %s4, %s236
      %v239 = vld [vmem:[%s222] sm:$0xff]
      %v240 = vld [vmem:[%s222 + $0x8] sm:$0xff]
      %v241 = vld [vmem:[%s222 + $0x10] sm:$0xff]
      %v242 = vld [vmem:[%s222 + $0x18] sm:$0xff]
      %v243 = vld [vmem:[%s222 + $0x20] sm:$0xff]
      %v244 = vld [vmem:[%s222 + $0x28] sm:$0xff]
      %v245 = vld [vmem:[%s222 + $0x30] sm:$0xff]
      %v246 = vld [vmem:[%s222 + $0x38] sm:$0xff]
      %v247 = vld [vmem:[%s222 + $0x40] sm:$0xff]
      %v248 = vld [vmem:[%s222 + $0x48] sm:$0xff]
      %v249 = vld [vmem:[%s222 + $0x50] sm:$0xff]
      %v250 = vld [vmem:[%s222 + $0x58] sm:$0xff]
      %v251 = vld [vmem:[%s222 + $0x60] sm:$0xff]
      %v252 = vld [vmem:[%s222 + $0x68] sm:$0xff]
      %v253 = vld [vmem:[%s222 + $0x70] sm:$0xff]
      %v254 = vld [vmem:[%s222 + $0x78] sm:$0xff]
      %v255 = vmul.f32 %v239, 0.125
      %v256 = vmul.f32 %v240, 0.125
      %v257 = vmul.f32 %v241, 0.125
      %v258 = vmul.f32 %v242, 0.125
      %v259 = vmul.f32 %v243, 0.125
      %v260 = vmul.f32 %v244, 0.125
      %v261 = vmul.f32 %v245, 0.125
      %v262 = vmul.f32 %v246, 0.125
      %v263 = vmul.f32 %v247, 0.125
      %v264 = vmul.f32 %v248, 0.125
      %v265 = vmul.f32 %v249, 0.125
      %v266 = vmul.f32 %v250, 0.125
      %v267 = vmul.f32 %v251, 0.125
      %v268 = vmul.f32 %v252, 0.125
      %v269 = vmul.f32 %v253, 0.125
      %v270 = vmul.f32 %v254, 0.125
      %v271 = vpack.c.bf16 %v256, %v255
      %v272 = vpack.c.bf16 %v258, %v257
      %v273 = vpack.c.bf16 %v260, %v259
      %v274 = vpack.c.bf16 %v262, %v261
      %v275 = vpack.c.bf16 %v264, %v263
      %v276 = vpack.c.bf16 %v266, %v265
      %v277 = vpack.c.bf16 %v268, %v267
      %v278 = vpack.c.bf16 %v270, %v269
      %v279 = vld [vmem:[%s227] sm:$0xff]
      %v280 = vld [vmem:[%s227 + $0x8] sm:$0xff]
      %v281 = vld [vmem:[%s227 + $0x10] sm:$0xff]
      %v282 = vld [vmem:[%s227 + $0x18] sm:$0xff]
      %v283 = vld [vmem:[%s227 + $0x20] sm:$0xff]
      %v284 = vld [vmem:[%s227 + $0x28] sm:$0xff]
      %v285 = vld [vmem:[%s227 + $0x30] sm:$0xff]
      %v286 = vld [vmem:[%s227 + $0x38] sm:$0xff]
      %v287 = vld [vmem:[%s227 + $0x40] sm:$0xff]
      %v288 = vld [vmem:[%s227 + $0x48] sm:$0xff]
      %v289 = vld [vmem:[%s227 + $0x50] sm:$0xff]
      %v290 = vld [vmem:[%s227 + $0x58] sm:$0xff]
      %v291 = vld [vmem:[%s227 + $0x60] sm:$0xff]
      %v292 = vld [vmem:[%s227 + $0x68] sm:$0xff]
      %v293 = vld [vmem:[%s227 + $0x70] sm:$0xff]
      %v294 = vld [vmem:[%s227 + $0x78] sm:$0xff]
      %v295 = vpack.c.bf16 %v280, %v279
      %v296 = vpack.c.bf16 %v282, %v281
      %v297 = vpack.c.bf16 %v284, %v283
      %v298 = vpack.c.bf16 %v286, %v285
      %v299 = vpack.c.bf16 %v288, %v287
      %v300 = vpack.c.bf16 %v290, %v289
      %v301 = vpack.c.bf16 %v292, %v291
      %v302 = vpack.c.bf16 %v294, %v293
      %v303 = vld [vmem:[%s3] sm:$0x1]
      %v305 = vlaneseq
      %v306 = vshrl.u32 %v305, 7
      %v307 = vsub.s32 0, %v306
      %v308 = vrot.slane %v303, %v307
      %vm310 = vcmask 523264
      %v312 = vsel %vm310, %v271, 0
      %v315 = vsel %vm310, %v272, 0
      %v318 = vsel %vm310, %v273, 0
      %v321 = vsel %vm310, %v274, 0
      %v324 = vsel %vm310, %v275, 0
      %v327 = vsel %vm310, %v276, 0
      %v330 = vsel %vm310, %v277, 0
      %v333 = vsel %vm310, %v278, 0
      %v336 = vsel %vm310, %v295, 0
      %v339 = vsel %vm310, %v296, 0
      %v342 = vsel %vm310, %v297, 0
      %v345 = vsel %vm310, %v298, 0
      %v348 = vsel %vm310, %v299, 0
      %v351 = vsel %vm310, %v300, 0
      %v354 = vsel %vm310, %v301, 0
      %v357 = vsel %vm310, %v302, 0
      %359 = vmatprep.subr.bf16.mxu0 0
      %360 = vmatpush1.bf16.xpose.msra.mxu0 %v336
      %361 = vmatprep.subr.bf16.mxu0 0
      %362 = vmatpush1.bf16.xpose.msra.mxu0 %v339
      %363 = vmatprep.subr.bf16.mxu0 0
      %364 = vmatpush1.bf16.xpose.msra.mxu0 %v342
      %365 = vmatprep.subr.bf16.mxu0 0
      %366 = vmatpush1.bf16.xpose.msra.mxu0 %v345
      %367 = vmatprep.subr.bf16.mxu0 0
      %368 = vmatpush1.bf16.xpose.msra.mxu0 %v348
      %369 = vmatprep.subr.bf16.mxu0 0
      %370 = vmatpush1.bf16.xpose.msra.mxu0 %v351
      %371 = vmatprep.subr.bf16.mxu0 0
      %372 = vmatpush1.bf16.xpose.msra.mxu0 %v354
      %373 = vmatprep.subr.bf16.mxu0 0
      %374 = vmatpush1.bf16.xpose.msra.mxu0 %v357
      %375 = vmatprep.subr.bf16.mxu0 0
      %376 = vmatpush1.bf16.xpose.msra.mxu0 0
      %377 = vmatprep.subr.bf16.mxu0 0
      %378 = vmatpush1.bf16.xpose.msra.mxu0 0
      %379 = vmatprep.subr.bf16.mxu0 0
      %380 = vmatpush1.bf16.xpose.msra.mxu0 0
      %381 = vmatprep.subr.bf16.mxu0 0
      %382 = vmatpush1.bf16.xpose.msra.mxu0 0
      %383 = vmatprep.subr.bf16.mxu0 0
      %384 = vmatpush1.bf16.xpose.msra.mxu0 0
      %385 = vmatprep.subr.bf16.mxu0 0
      %386 = vmatpush1.bf16.xpose.msra.mxu0 0
      %387 = vmatprep.subr.bf16.mxu0 0
      %388 = vmatpush1.bf16.xpose.msra.mxu0 0
      %389 = vmatprep.subr.bf16.mxu0 0
      %390 = vmatpush1.bf16.xpose.msra.mxu0 0
      %391 = vmatprep.mubr.bf16.mxu0 0
      %392 = vmatmul.mubr.bf16.gmra.mrb[0].mxu0 %v312
      %v393 = vpop.f32.mrb[0].mxu0
      %v394 = vadd.f32 %v308, %v393
      %v395 = vpop.f32.mrb[0].mxu0
      %v396 = vpop.f32.mrb[0].mxu0
      %v397 = vadd.f32 %v308, %v396
      %v398 = vpop.f32.mrb[0].mxu0
      %399 = vmatprep.mubr.bf16.mxu0 0
      %400 = vmatmul.mubr.bf16.gmra.mrb[0].mxu0 %v315
      %v401 = vpop.f32.mrb[0].mxu0
      %v402 = vadd.f32 %v308, %v401
      %v403 = vpop.f32.mrb[0].mxu0
      %v404 = vpop.f32.mrb[0].mxu0
      %v405 = vadd.f32 %v308, %v404
      %v406 = vpop.f32.mrb[0].mxu0
      %407 = vmatprep.mubr.bf16.mxu0 0
      %408 = vmatmul.mubr.bf16.gmra.mrb[0].mxu0 %v318
      %v409 = vpop.f32.mrb[0].mxu0
      %v410 = vadd.f32 %v308, %v409
      %v411 = vpop.f32.mrb[0].mxu0
      %v412 = vpop.f32.mrb[0].mxu0
      %v413 = vadd.f32 %v308, %v412
      %v414 = vpop.f32.mrb[0].mxu0
      %415 = vmatprep.mubr.bf16.mxu0 0
      %416 = vmatmul.mubr.bf16.gmra.mrb[0].mxu0 %v321
      %v417 = vpop.f32.mrb[0].mxu0
      %v418 = vadd.f32 %v308, %v417
      %v419 = vpop.f32.mrb[0].mxu0
      %v420 = vpop.f32.mrb[0].mxu0
      %v421 = vadd.f32 %v308, %v420
      %v422 = vpop.f32.mrb[0].mxu0
      %423 = vmatprep.mubr.bf16.mxu0 0
      %424 = vmatmul.mubr.bf16.gmra.mrb[0].mxu0 %v324
      %v425 = vpop.f32.mrb[0].mxu0
      %v426 = vadd.f32 %v308, %v425
      %v427 = vpop.f32.mrb[0].mxu0
      %v428 = vpop.f32.mrb[0].mxu0
      %v429 = vadd.f32 %v308, %v428
      %v430 = vpop.f32.mrb[0].mxu0
      %431 = vmatprep.mubr.bf16.mxu0 0
      %432 = vmatmul.mubr.bf16.gmra.mrb[0].mxu0 %v327
      %v433 = vpop.f32.mrb[0].mxu0
      %v434 = vadd.f32 %v308, %v433
      %v435 = vpop.f32.mrb[0].mxu0
      %v436 = vpop.f32.mrb[0].mxu0
      %v437 = vadd.f32 %v308, %v436
      %v438 = vpop.f32.mrb[0].mxu0
      %439 = vmatprep.mubr.bf16.mxu0 0
      %440 = vmatmul.mubr.bf16.gmra.mrb[0].mxu0 %v330
      %v441 = vpop.f32.mrb[0].mxu0
      %v442 = vadd.f32 %v308, %v441
      %v443 = vpop.f32.mrb[0].mxu0
      %v444 = vpop.f32.mrb[0].mxu0
      %v445 = vadd.f32 %v308, %v444
      %v446 = vpop.f32.mrb[0].mxu0
      %447 = vmatprep.mubr.bf16.mxu0 0
      %448 = vmatmul.mubr.bf16.gmra.mrb[0].mxu0 %v333
      %v449 = vpop.f32.mrb[0].mxu0
      %v450 = vadd.f32 %v308, %v449
      %v451 = vpop.f32.mrb[0].mxu0
      %v452 = vpop.f32.mrb[0].mxu0
      %v453 = vadd.f32 %v308, %v452
      %v454 = vpop.f32.mrb[0].mxu0
      %455 = vdwg.mxu0
      %456 = vmax.xlane.f32.xlu0 %v394
      %v457 = vpop.xlane.xlu0 %456
      %458 = vmax.xlane.f32.xlu0 %v397
      %v459 = vpop.xlane.xlu0 %458
      %460 = vmax.xlane.f32.xlu0 %v402
      %v461 = vpop.xlane.xlu0 %460
      %462 = vmax.xlane.f32.xlu0 %v405
      %v463 = vpop.xlane.xlu0 %462
      %464 = vmax.xlane.f32.xlu0 %v410
      %v465 = vpop.xlane.xlu0 %464
      %466 = vmax.xlane.f32.xlu0 %v413
      %v467 = vpop.xlane.xlu0 %466
      %468 = vmax.xlane.f32.xlu0 %v418
      %v469 = vpop.xlane.xlu0 %468
      %470 = vmax.xlane.f32.xlu0 %v421
      %v471 = vpop.xlane.xlu0 %470
      %472 = vmax.xlane.f32.xlu0 %v426
      %v473 = vpop.xlane.xlu0 %472
      %474 = vmax.xlane.f32.xlu0 %v429
      %v475 = vpop.xlane.xlu0 %474
      %476 = vmax.xlane.f32.xlu0 %v434
      %v477 = vpop.xlane.xlu0 %476
      %478 = vmax.xlane.f32.xlu0 %v437
      %v479 = vpop.xlane.xlu0 %478
      %480 = vmax.xlane.f32.xlu0 %v442
      %v481 = vpop.xlane.xlu0 %480
      %482 = vmax.xlane.f32.xlu0 %v445
      %v483 = vpop.xlane.xlu0 %482
      %484 = vmax.xlane.f32.xlu0 %v450
      %v485 = vpop.xlane.xlu0 %484
      %486 = vmax.xlane.f32.xlu0 %v453
      %v487 = vpop.xlane.xlu0 %486
      %v488 = vsub.f32 %v394, %v457
      %v489 = vsub.f32 %v397, %v459
      %v490 = vsub.f32 %v402, %v461
      %v491 = vsub.f32 %v405, %v463
      %v492 = vsub.f32 %v410, %v465
      %v493 = vsub.f32 %v413, %v467
      %v494 = vsub.f32 %v418, %v469
      %v495 = vsub.f32 %v421, %v471
      %v496 = vsub.f32 %v426, %v473
      %v497 = vsub.f32 %v429, %v475
      %v498 = vsub.f32 %v434, %v477
      %v499 = vsub.f32 %v437, %v479
      %v500 = vsub.f32 %v442, %v481
      %v501 = vsub.f32 %v445, %v483
      %v502 = vsub.f32 %v450, %v485
      %v503 = vsub.f32 %v453, %v487
      %v504 = vmul.f32 %v488, 1.442695
      %v505 = vpow.pop %v504
      %v506 = vmul.f32 %v489, 1.442695
      %v507 = vpow.pop %v506
      %v508 = vmul.f32 %v490, 1.442695
      %v509 = vpow.pop %v508
      %v510 = vmul.f32 %v491, 1.442695
      %v511 = vpow.pop %v510
      %v512 = vmul.f32 %v492, 1.442695
      %v513 = vpow.pop %v512
      %v514 = vmul.f32 %v493, 1.442695
      %v515 = vpow.pop %v514
      %v516 = vmul.f32 %v494, 1.442695
      %v517 = vpow.pop %v516
      %v518 = vmul.f32 %v495, 1.442695
      %v519 = vpow.pop %v518
      %v520 = vmul.f32 %v496, 1.442695
      %v521 = vpow.pop %v520
      %v522 = vmul.f32 %v497, 1.442695
      %v523 = vpow.pop %v522
      %v524 = vmul.f32 %v498, 1.442695
      %v525 = vpow.pop %v524
      %v526 = vmul.f32 %v499, 1.442695
      %v527 = vpow.pop %v526
      %v528 = vmul.f32 %v500, 1.442695
      %v529 = vpow.pop %v528
      %v530 = vmul.f32 %v501, 1.442695
      %v531 = vpow.pop %v530
      %v532 = vmul.f32 %v502, 1.442695
      %v533 = vpow.pop %v532
      %v534 = vmul.f32 %v503, 1.442695
      %v535 = vpow.pop %v534
      %536 = vadd.xlane.f32.xlu0 %v505
      %v537 = vpop.xlane.xlu0 %536
      %538 = vadd.xlane.f32.xlu0 %v507
      %v539 = vpop.xlane.xlu0 %538
      %540 = vadd.xlane.f32.xlu0 %v509
      %v541 = vpop.xlane.xlu0 %540
      %542 = vadd.xlane.f32.xlu0 %v511
      %v543 = vpop.xlane.xlu0 %542
      %544 = vadd.xlane.f32.xlu0 %v513
      %v545 = vpop.xlane.xlu0 %544
      %546 = vadd.xlane.f32.xlu0 %v515
      %v547 = vpop.xlane.xlu0 %546
      %548 = vadd.xlane.f32.xlu0 %v517
      %v549 = vpop.xlane.xlu0 %548
      %550 = vadd.xlane.f32.xlu0 %v519
      %v551 = vpop.xlane.xlu0 %550
      %552 = vadd.xlane.f32.xlu0 %v521
      %v553 = vpop.xlane.xlu0 %552
      %554 = vadd.xlane.f32.xlu0 %v523
      %v555 = vpop.xlane.xlu0 %554
      %556 = vadd.xlane.f32.xlu0 %v525
      %v557 = vpop.xlane.xlu0 %556
      %558 = vadd.xlane.f32.xlu0 %v527
      %v559 = vpop.xlane.xlu0 %558
      %560 = vadd.xlane.f32.xlu0 %v529
      %v561 = vpop.xlane.xlu0 %560
      %562 = vadd.xlane.f32.xlu0 %v531
      %v563 = vpop.xlane.xlu0 %562
      %564 = vadd.xlane.f32.xlu0 %v533
      %v565 = vpop.xlane.xlu0 %564
      %566 = vadd.xlane.f32.xlu0 %v535
      %v567 = vpop.xlane.xlu0 %566
      %v568 = vpack.c.bf16 %v507, %v505
      %v569 = vpack.c.bf16 %v511, %v509
      %v570 = vpack.c.bf16 %v515, %v513
      %v571 = vpack.c.bf16 %v519, %v517
      %v572 = vpack.c.bf16 %v523, %v521
      %v573 = vpack.c.bf16 %v527, %v525
      %v574 = vpack.c.bf16 %v531, %v529
      %v575 = vpack.c.bf16 %v535, %v533
      %v576 = vld [vmem:[%s232] sm:$0xff]
      %v577 = vld [vmem:[%s232 + $0x8] sm:$0xff]
      %v578 = vld [vmem:[%s232 + $0x10] sm:$0xff]
      %v579 = vld [vmem:[%s232 + $0x18] sm:$0xff]
      %v580 = vld [vmem:[%s232 + $0x20] sm:$0xff]
      %v581 = vld [vmem:[%s232 + $0x28] sm:$0xff]
      %v582 = vld [vmem:[%s232 + $0x30] sm:$0xff]
      %v583 = vld [vmem:[%s232 + $0x38] sm:$0xff]
      %v584 = vld [vmem:[%s232 + $0x40] sm:$0xff]
      %v585 = vld [vmem:[%s232 + $0x48] sm:$0xff]
      %v586 = vld [vmem:[%s232 + $0x50] sm:$0xff]
      %v587 = vld [vmem:[%s232 + $0x58] sm:$0xff]
      %v588 = vld [vmem:[%s232 + $0x60] sm:$0xff]
      %v589 = vld [vmem:[%s232 + $0x68] sm:$0xff]
      %v590 = vld [vmem:[%s232 + $0x70] sm:$0xff]
      %v591 = vld [vmem:[%s232 + $0x78] sm:$0xff]
      %v592 = vpack.c.bf16 %v577, %v576
      %v593 = vpack.c.bf16 %v579, %v578
      %v594 = vpack.c.bf16 %v581, %v580
      %v595 = vpack.c.bf16 %v583, %v582
      %v596 = vpack.c.bf16 %v585, %v584
      %v597 = vpack.c.bf16 %v587, %v586
      %v598 = vpack.c.bf16 %v589, %v588
      %v599 = vpack.c.bf16 %v591, %v590
      %600 = vmatprep.subr.bf16.mxu0 0
      %601 = vmatpush1.bf16.msra.mxu0 %v592
      %602 = vmatprep.subr.bf16.mxu0 0
      %603 = vmatpush1.bf16.msra.mxu0 %v593
      %604 = vmatprep.subr.bf16.mxu0 0
      %605 = vmatpush1.bf16.msra.mxu0 %v594
      %606 = vmatprep.subr.bf16.mxu0 0
      %607 = vmatpush1.bf16.msra.mxu0 %v595
      %608 = vmatprep.subr.bf16.mxu0 0
      %609 = vmatpush1.bf16.msra.mxu0 %v596
      %610 = vmatprep.subr.bf16.mxu0 0
      %611 = vmatpush1.bf16.msra.mxu0 %v597
      %612 = vmatprep.subr.bf16.mxu0 0
      %613 = vmatpush1.bf16.msra.mxu0 %v598
      %614 = vmatprep.subr.bf16.mxu0 0
      %615 = vmatpush1.bf16.msra.mxu0 %v599
      %616 = vmatprep.subr.bf16.mxu0 0
      %617 = vmatpush1.bf16.msra.mxu0 0
      %618 = vmatprep.subr.bf16.mxu0 0
      %619 = vmatpush1.bf16.msra.mxu0 0
      %620 = vmatprep.subr.bf16.mxu0 0
      %621 = vmatpush1.bf16.msra.mxu0 0
      %622 = vmatprep.subr.bf16.mxu0 0
      %623 = vmatpush1.bf16.msra.mxu0 0
      %624 = vmatprep.subr.bf16.mxu0 0
      %625 = vmatpush1.bf16.msra.mxu0 0
      %626 = vmatprep.subr.bf16.mxu0 0
      %627 = vmatpush1.bf16.msra.mxu0 0
      %628 = vmatprep.subr.bf16.mxu0 0
      %629 = vmatpush1.bf16.msra.mxu0 0
      %630 = vmatprep.subr.bf16.mxu0 0
      %631 = vmatpush1.bf16.msra.mxu0 0
      %632 = vmatprep.mubr.bf16.mxu0 0
      %633 = vmatmul.mubr.bf16.gmra.mrb[0].mxu0 %v568
      %v634 = vpop.f32.mrb[0].mxu0
      %v635 = vadd.f32 0.0, %v634
      %v636 = vpop.f32.mrb[0].mxu0
      %v637 = vpop.f32.mrb[0].mxu0
      %v638 = vadd.f32 0.0, %v637
      %v639 = vpop.f32.mrb[0].mxu0
      %640 = vmatprep.mubr.bf16.mxu0 0
      %641 = vmatmul.mubr.bf16.gmra.mrb[0].mxu0 %v569
      %v642 = vpop.f32.mrb[0].mxu0
      %v643 = vadd.f32 0.0, %v642
      %v644 = vpop.f32.mrb[0].mxu0
      %v645 = vpop.f32.mrb[0].mxu0
      %v646 = vadd.f32 0.0, %v645
      %v647 = vpop.f32.mrb[0].mxu0
      %648 = vmatprep.mubr.bf16.mxu0 0
      %649 = vmatmul.mubr.bf16.gmra.mrb[0].mxu0 %v570
      %v650 = vpop.f32.mrb[0].mxu0
      %v651 = vadd.f32 0.0, %v650
      %v652 = vpop.f32.mrb[0].mxu0
      %v653 = vpop.f32.mrb[0].mxu0
      %v654 = vadd.f32 0.0, %v653
      %v655 = vpop.f32.mrb[0].mxu0
      %656 = vmatprep.mubr.bf16.mxu0 0
      %657 = vmatmul.mubr.bf16.gmra.mrb[0].mxu0 %v571
      %v658 = vpop.f32.mrb[0].mxu0
      %v659 = vadd.f32 0.0, %v658
      %v660 = vpop.f32.mrb[0].mxu0
      %v661 = vpop.f32.mrb[0].mxu0
      %v662 = vadd.f32 0.0, %v661
      %v663 = vpop.f32.mrb[0].mxu0
      %664 = vmatprep.mubr.bf16.mxu0 0
      %665 = vmatmul.mubr.bf16.gmra.mrb[0].mxu0 %v572
      %v666 = vpop.f32.mrb[0].mxu0
      %v667 = vadd.f32 0.0, %v666
      %v668 = vpop.f32.mrb[0].mxu0
      %v669 = vpop.f32.mrb[0].mxu0
      %v670 = vadd.f32 0.0, %v669
      %v671 = vpop.f32.mrb[0].mxu0
      %672 = vmatprep.mubr.bf16.mxu0 0
      %673 = vmatmul.mubr.bf16.gmra.mrb[0].mxu0 %v573
      %v674 = vpop.f32.mrb[0].mxu0
      %v675 = vadd.f32 0.0, %v674
      %v676 = vpop.f32.mrb[0].mxu0
      %v677 = vpop.f32.mrb[0].mxu0
      %v678 = vadd.f32 0.0, %v677
      %v679 = vpop.f32.mrb[0].mxu0
      %680 = vmatprep.mubr.bf16.mxu0 0
      %681 = vmatmul.mubr.bf16.gmra.mrb[0].mxu0 %v574
      %v682 = vpop.f32.mrb[0].mxu0
      %v683 = vadd.f32 0.0, %v682
      %v684 = vpop.f32.mrb[0].mxu0
      %v685 = vpop.f32.mrb[0].mxu0
      %v686 = vadd.f32 0.0, %v685
      %v687 = vpop.f32.mrb[0].mxu0
      %688 = vmatprep.mubr.bf16.mxu0 0
      %689 = vmatmul.mubr.bf16.gmra.mrb[0].mxu0 %v575
      %v690 = vpop.f32.mrb[0].mxu0
      %v691 = vadd.f32 0.0, %v690
      %v692 = vpop.f32.mrb[0].mxu0
      %v693 = vpop.f32.mrb[0].mxu0
      %v694 = vadd.f32 0.0, %v693
      %v695 = vpop.f32.mrb[0].mxu0
      %696 = vdwg.mxu0
      %v697 = vrcp.pop %v537
      %v698 = vrcp.pop %v539
      %v699 = vrcp.pop %v541
      %v700 = vrcp.pop %v543
      %v701 = vrcp.pop %v545
      %v702 = vrcp.pop %v547
      %v703 = vrcp.pop %v549
      %v704 = vrcp.pop %v551
      %v705 = vrcp.pop %v553
      %v706 = vrcp.pop %v555
      %v707 = vrcp.pop %v557
      %v708 = vrcp.pop %v559
      %v709 = vrcp.pop %v561
      %v710 = vrcp.pop %v563
      %v711 = vrcp.pop %v565
      %v712 = vrcp.pop %v567
      %v713 = vmul.f32 %v635, %v697
      %v714 = vmul.f32 %v638, %v698
      %v715 = vmul.f32 %v643, %v699
      %v716 = vmul.f32 %v646, %v700
      %v717 = vmul.f32 %v651, %v701
      %v718 = vmul.f32 %v654, %v702
      %v719 = vmul.f32 %v659, %v703
      %v720 = vmul.f32 %v662, %v704
      %v721 = vmul.f32 %v667, %v705
      %v722 = vmul.f32 %v670, %v706
      %v723 = vmul.f32 %v675, %v707
      %v724 = vmul.f32 %v678, %v708
      %v725 = vmul.f32 %v683, %v709
      %v726 = vmul.f32 %v686, %v710
      %v727 = vmul.f32 %v691, %v711
      %v728 = vmul.f32 %v694, %v712
      %729 = vst.msk [vmem:[%s237] sm:$0xff] %vm310, %v713
      %730 = vst.msk [vmem:[%s237 + $0x8] sm:$0xff] %vm310, %v714
      %731 = vst.msk [vmem:[%s237 + $0x10] sm:$0xff] %vm310, %v715
      %732 = vst.msk [vmem:[%s237 + $0x18] sm:$0xff] %vm310, %v716
      %733 = vst.msk [vmem:[%s237 + $0x20] sm:$0xff] %vm310, %v717
      %734 = vst.msk [vmem:[%s237 + $0x28] sm:$0xff] %vm310, %v718
      %735 = vst.msk [vmem:[%s237 + $0x30] sm:$0xff] %vm310, %v719
      %736 = vst.msk [vmem:[%s237 + $0x38] sm:$0xff] %vm310, %v720
      %737 = vst.msk [vmem:[%s237 + $0x40] sm:$0xff] %vm310, %v721
      %738 = vst.msk [vmem:[%s237 + $0x48] sm:$0xff] %vm310, %v722
      %739 = vst.msk [vmem:[%s237 + $0x50] sm:$0xff] %vm310, %v723
      %740 = vst.msk [vmem:[%s237 + $0x58] sm:$0xff] %vm310, %v724
      %741 = vst.msk [vmem:[%s237 + $0x60] sm:$0xff] %vm310, %v725
      %742 = vst.msk [vmem:[%s237 + $0x68] sm:$0xff] %vm310, %v726
      %743 = vst.msk [vmem:[%s237 + $0x70] sm:$0xff] %vm310, %v727
      %744 = vst.msk [vmem:[%s237 + $0x78] sm:$0xff] %vm310, %v728
      %p745 = scmp.lt.s32.totalorder %s15, 1
      %s746 = scalar_select %p745, %s15, 1
      %s747 = smul.addr %s746, 16
      %s748 = smul.addr %s747, 8
      %s749 = scalar_lea.vmem %s4, %s748
      // Predicated region
      $region37: #{tpu_custom_call.1} parent=35 // pred_check
        %p750 = pneg %p132
      $region38: #{tpu_custom_call.1} parent=35 // pred_check_branch
        %752 = sbr.rel (%p750) target = $region40
      $region39: #{tpu_custom_call.1} parent=35 // pred_region
        _
      $region40: #{tpu_custom_call.1} parent=35 // pred_fallthru
        _
    $region36: #{tpu_custom_call.1} parent=5 // pred_fallthru
      _
    %p753 = scmp.le.s32.totalorder 2, %s10
    // Predicated region
    $region41: #{tpu_custom_call.1} parent=5 // pred_check
      %p754 = pneg %p753
    $region42: #{tpu_custom_call.1} parent=5 // pred_check_branch
      %756 = sbr.rel (%p754) target = $region44
    $region43: #{tpu_custom_call.1} parent=5 // pred_region
      %s757 = ssub.s32 %s10, 2
      // Predicated region
      $region45: #{tpu_custom_call.1} parent=43 // pred_check
        %p758 = pneg %p138
      $region46: #{tpu_custom_call.1} parent=43 // pred_check_branch
        %760 = sbr.rel (%p758) target = $region48
      $region47: #{tpu_custom_call.1} parent=43 // pred_region
        %p761 = scmp.lt.s32.totalorder %s16, 1
        %s762 = scalar_select %p761, %s16, 1
        %s763 = smul.addr %s762, 16
        %s764 = smul.addr %s763, 8
        %s765 = scalar_lea.vmem %s4, %s764
      $region48: #{tpu_custom_call.1} parent=43 // pred_fallthru
        _
    $region44: #{tpu_custom_call.1} parent=5 // pred_fallthru
      _
  $region6: #{tpu_custom_call.1} parent=0 // loop_footer
    %s14 = sadd.s32 1, %s10
  $region7: #{tpu_custom_call.1} parent=0 // loop_footer_branch
    %9 = sbr.rel target = $region3
  $region8: #{tpu_custom_call.1} parent=0 // loop_exit
    _

</llo_original>
